<compile_context>
chip_gen: v6e
topology: v6e:2x2x1
jax: 0.10.0
libtpu: 0.0.40
codegen_flags: <defaults>
</compile_context>

<pallas_src>
import functools

import jax
import jax.numpy as jnp
from jax import lax
from jax.experimental import pallas as pl
from jax.experimental.pallas import tpu as pltpu


def _kernel(*refs, dilation, multi_tile, compute_dtype):
    if multi_tile:
        (x_ref, lh_ref, rh_ref, m_ref, wall_ref, b1_ref,
         w1x1_ref, b2_ref, o_ref) = refs
    else:
        (x_ref, m_ref, wall_ref, b1_ref, w1x1_ref, b2_ref, o_ref) = refs
        lh_ref = rh_ref = None

    C = w1x1_ref.shape[0]
    d = dilation
    x = x_ref[...]                                  # (C, Tt) f32
    Tt = x.shape[1]

    xc = x.astype(compute_dtype)
    w_all = wall_ref[...].astype(compute_dtype)     # (3C, C): rows [W0; W1; W2]

    # One stacked MXU matmul (M=3C, K=C, N=Tt) produces all three tap partials:
    #   z0 = W0 @ x (tap x[t-d]), z1 = W1 @ x (tap x[t]), z2 = W2 @ x (tap x[t+d]).
    z = jnp.dot(w_all, xc, preferred_element_type=jnp.float32)      # (3C, Tt) f32
    z0 = z[0:C, :]
    z1 = z[C:2 * C, :]
    z2 = z[2 * C:3 * C, :]

    # Shift the *outputs* (review option (b)): no xl / xr / x_cat temporaries.
    z0s = pltpu.roll(z0, d % Tt, axis=1)            # z0s[:, t] = z0[:, t-d]   (t >= d)
    z2s = pltpu.roll(z2, (Tt - d) % Tt, axis=1)     # z2s[:, t] = z2[:, t+d]   (t < Tt-d)

    if multi_tile:
        tt = pl.program_id(1)
        n_t = pl.num_programs(1)
        Hw = lh_ref.shape[1]                        # 128 (halo block width)
        t128 = lax.broadcasted_iota(jnp.int32, (1, Hw), 1)

        w0 = wall_ref[0:C, :].astype(compute_dtype)
        w2 = wall_ref[2 * C:3 * C, :].astype(compute_dtype)
        # Tiny (C, 128) halo matmuls; only `d` lanes of each are consumed.
        zh0 = jnp.dot(w0, lh_ref[...].astype(compute_dtype),
                      preferred_element_type=jnp.float32)
        zh2 = jnp.dot(w2, rh_ref[...].astype(compute_dtype),
                      preferred_element_type=jnp.float32)
        # After the rolls: zh0 lanes [0, d) hold z0 from the previous tile,
        #                  zh2 lanes [Hw-d, Hw) hold z2 from the next tile.
        zh0 = pltpu.roll(zh0, d % Hw, axis=1)
        zh2 = pltpu.roll(zh2, (Hw - d) % Hw, axis=1)
        zh0 = jnp.where(tt == 0, 0.0, zh0)          # global left edge -> zero padding
        zh2 = jnp.where(tt == n_t - 1, 0.0, zh2)    # global right edge -> zero padding

        left_head = jnp.where(t128 < d, zh0, z0s[:, :Hw])
        right_tail = jnp.where(t128 >= Hw - d, zh2, z2s[:, Tt - Hw:])
        if Tt > Hw:
            left = jnp.concatenate([left_head, z0s[:, Hw:]], axis=1)
            right = jnp.concatenate([z2s[:, :Tt - Hw], right_tail], axis=1)
        else:
            left, right = left_head, right_tail
    else:
        # Single tile: edges are plain zero padding (correct even when d >= Tt).
        t_idx = lax.broadcasted_iota(jnp.int32, (1, Tt), 1)
        left = jnp.where(t_idx < d, 0.0, z0s)
        right = jnp.where(t_idx >= Tt - d, 0.0, z2s)

    # Dilated-conv bias + ReLU.
    h = jnp.maximum(z1 + left + right + b1_ref[...], 0.0)

    # 1x1 conv == channel matmul.
    o = jnp.dot(w1x1_ref[...].astype(compute_dtype), h.astype(compute_dtype),
                preferred_element_type=jnp.float32) + b2_ref[...]

    # TODO(synk): nn.Dropout is identity in eval mode; training-mode dropout not modeled.

    # Residual + mask (mask (1, Tt) broadcasts over channels); lane-dense store.
    o_ref[...] = ((x + o) * m_ref[...]).astype(o_ref.dtype)


def _pick_t_tile(T, d, max_tile):
    """Choose (T_tile, num_t). Multi-tile only when the 128-lane halo scheme applies."""
    max_tile = max((max_tile // 128) * 128, 128)
    if T <= max_tile:
        return T, 1
    # TODO(synk): dilations > 128 fall back to whole-T blocks (halo would span more
    # than one 128-lane halo block).
    if d > 128 or T % 128 != 0:
        return T, 1
    tile = 128
    for cand in range(max_tile, 127, -128):
        if T % cand == 0:
            tile = cand
            break
    return tile, T // tile


def dilated_residual_layer_asrf(x_nct, mask_nct, params, dilation, *,
                                max_t_tile=1024, compute_dtype=jnp.float32):
    """x_nct: (N, C, T) f32, mask_nct: (N, Cm, T). Returns (N, C, T)."""
    w_dil, b_dil, w_in, b_in = params               # (C,C,3), (C,), (C,C,1), (C,)
    N, C, T = x_nct.shape
    d = int(dilation)
    assert d >= 1

    T_tile, num_t = _pick_t_tile(T, d, max_t_tile)
    multi_tile = num_t > 1
    Hw = min(128, T)                                # halo block width
    r = T_tile // Hw if multi_tile else 1
    n_hblocks = T // Hw if multi_tile else 1

    # Tiny parameter prep (no transpose / pad / shift of the big x tensor).
    w_all = jnp.concatenate([w_dil[:, :, 0], w_dil[:, :, 1], w_dil[:, :, 2]],
                            axis=0)                 # (3C, C): rows [W0; W1; W2]
    w_1x1 = w_in[:, :, 0]                           # (C, C)
    b1 = b_dil.reshape(C, 1)
    b2 = b_in.reshape(C, 1)
    mask_row = mask_nct[:, 0:1, :].astype(x_nct.dtype)          # (N, 1, T)

    if multi_tile:
        # Last 128 columns of the previous time tile / first 128 of the next tile,
        # clamped at the edges (the clamped values are zeroed inside the kernel).
        lhalo_map = lambda n, t: (n, 0, jnp.maximum(t * r - 1, 0))
        rhalo_map = lambda n, t: (n, 0, jnp.minimum((t + 1) * r, n_hblocks - 1))
    else:
        lhalo_map = rhalo_map = None

    x_spec = pl.BlockSpec((None, C, T_tile), lambda n, t: (n, 0, t))
    in_specs = [x_spec]
    args = [x_nct]
    if multi_tile:
        in_specs += [pl.BlockSpec((None, C, Hw), lhalo_map),
                     pl.BlockSpec((None, C, Hw), rhalo_map)]
        args += [x_nct, x_nct]
    in_specs += [
        pl.BlockSpec((None, 1, T_tile), lambda n, t: (n, 0, t)),    # mask row
        pl.BlockSpec((3 * C, C), lambda n, t: (0, 0)),              # W_all (resident)
        pl.BlockSpec((C, 1), lambda n, t: (0, 0)),                  # b1
        pl.BlockSpec((C, C), lambda n, t: (0, 0)),                  # W_1x1
        pl.BlockSpec((C, 1), lambda n, t: (0, 0)),                  # b2
    ]
    args += [mask_row, w_all, b1, w_1x1, b2]

    kernel = functools.partial(_kernel, dilation=d, multi_tile=multi_tile,
                               compute_dtype=compute_dtype)

    grid_spec = pltpu.PrefetchScalarGridSpec(
        num_scalar_prefetch=0,
        grid=(N, num_t),
        in_specs=in_specs,
        out_specs=pl.BlockSpec((None, C, T_tile), lambda n, t: (n, 0, t)),
    )

    # ~3 CxT_tile live slabs + double-buffered x/out + resident weights, with headroom.
    slab = C * T_tile * 4
    vmem_limit = int(min(48 * 2**20, max(16 * 2**20, 14 * slab + 8 * C * C * 4)))

    return pl.pallas_call(
        kernel,
        out_shape=jax.ShapeDtypeStruct((N, C, T), x_nct.dtype),
        grid_spec=grid_spec,
        compiler_params=pltpu.CompilerParams(
            dimension_semantics=("parallel", "parallel"),
            vmem_limit_bytes=vmem_limit),
    )(*args)


def _reference(x_nct, mask_nct, params, dilation):
    """Plain-JAX reference mirroring the PyTorch forward (eval mode)."""
    w_dil, b_dil, w_in, b_in = params
    out = lax.conv_general_dilated(
        x_nct, w_dil, window_strides=(1,),
        padding=[(dilation, dilation)], rhs_dilation=(dilation,),
        dimension_numbers=("NCH", "OIH", "NCH"))
    out = out + b_dil[None, :, None]
    out = jnp.maximum(out, 0.0)
    out = lax.conv_general_dilated(
        out, w_in, window_strides=(1,), padding=[(0, 0)],
        dimension_numbers=("NCH", "OIH", "NCH"))
    out = out + b_in[None, :, None]
    return (x_nct + out) * mask_nct[:, 0:1, :]


if __name__ == "__main__":
    def run_case(N, C, T, dilation, seed):
        key = jax.random.PRNGKey(seed)
        k1, k2, k3, k4, k5, k6 = jax.random.split(key, 6)
        x = jax.random.normal(k1, (N, C, T), dtype=jnp.float32)
        mask = (jax.random.uniform(k2, (N, C, T)) > 0.2).astype(jnp.float32)
        w_dilated = 0.1 * jax.random.normal(k3, (C, C, 3), dtype=jnp.float32)
        b_dilated = 0.1 * jax.random.normal(k4, (C,), dtype=jnp.float32)
        w_conv_in = 0.1 * jax.random.normal(k5, (C, C, 1), dtype=jnp.float32)
        b_conv_in = 0.1 * jax.random.normal(k6, (C,), dtype=jnp.float32)
        params = (w_dilated, b_dilated, w_conv_in, b_conv_in)

        out = dilated_residual_layer_asrf(x, mask, params, dilation)
        out = jax.block_until_ready(out)
        ref = _reference(x, mask, params, dilation)
        assert out.shape == (N, C, T)
        assert jnp.allclose(out, ref, atol=1e-4, rtol=1e-4), (
            f"mismatch vs reference N={N} C={C} T={T} d={dilation}")

    # Benchmark shape: single time tile, grid (N, 1).
    run_case(2, 64, 128, 2, 0)
    # Multi-tile path with cross-tile halo (T_tile=1024, 2 time tiles).
    run_case(1, 64, 2048, 3, 1)
    # Boundary case: dilation == halo width (128).
    run_case(1, 64, 2048, 128, 2)

    print("KERNEL_OK")
</pallas_src>

<mosaic_0001>
module attributes {stable_mosaic.version = 11 : i64} {
  func.func @_kernel(%arg0: i32, %arg1: i32, %arg2: memref<1x64x128xf32, #tpu.memory_space<vmem>>, %arg3: memref<1x1x128xf32, #tpu.memory_space<vmem>>, %arg4: memref<192x64xf32, #tpu.memory_space<vmem>>, %arg5: memref<64x1xf32, #tpu.memory_space<vmem>>, %arg6: memref<64x64xf32, #tpu.memory_space<vmem>>, %arg7: memref<64x1xf32, #tpu.memory_space<vmem>>, %arg8: memref<1x64x128xf32, #tpu.memory_space<vmem>>) attributes {dimension_semantics = [#tpu.dimension_semantics<parallel>, #tpu.dimension_semantics<parallel>], iteration_bounds = array<i64: 2, 1>, scalar_prefetch = 0 : i64, scratch_operands = 0 : i64, tpu.core_type = #tpu.core_type<tc>, window_params = [{transform_indices = @transform_0, window_bounds = array<i64: 1, 64, 128>}, {transform_indices = @transform_1, window_bounds = array<i64: 1, 1, 128>}, {pipeline_mode = #tpu.pipeline_mode<synchronous>, transform_indices = @transform_2, window_bounds = array<i64: 192, 64>}, {pipeline_mode = #tpu.pipeline_mode<synchronous>, transform_indices = @transform_3, window_bounds = array<i64: 64, 1>}, {pipeline_mode = #tpu.pipeline_mode<synchronous>, transform_indices = @transform_4, window_bounds = array<i64: 64, 64>}, {pipeline_mode = #tpu.pipeline_mode<synchronous>, transform_indices = @transform_5, window_bounds = array<i64: 64, 1>}, {transform_indices = @transform_6, window_bounds = array<i64: 1, 64, 128>}]} {
    %c0 = arith.constant 0 : index
    %c0_0 = arith.constant 0 : index
    %c0_1 = arith.constant 0 : index
    %0 = vector.load %arg2[%c0, %c0_0, %c0_1] : memref<1x64x128xf32, #tpu.memory_space<vmem>>, vector<1x64x128xf32>
    %1 = vector.shape_cast %0 : vector<1x64x128xf32> to vector<64x128xf32>
    %c0_2 = arith.constant 0 : index
    %c0_3 = arith.constant 0 : index
    %2 = vector.load %arg4[%c0_2, %c0_3] : memref<192x64xf32, #tpu.memory_space<vmem>>, vector<192x64xf32>
    %cst = arith.constant dense<0.000000e+00> : vector<192x128xf32>
    %3 = tpu.matmul %2, %1, %cst {dimension_numbers = #tpu.dot_dimension_numbers<[1], [0], [0], [1], [0, 0, 1, 1], [], []>} : vector<192x64xf32>, vector<64x128xf32>, vector<192x128xf32> -> vector<192x128xf32>
    %4 = vector.extract_strided_slice %3 {offsets = [0, 0], sizes = [64, 128], strides = [1, 1]} : vector<192x128xf32> to vector<64x128xf32>
    %5 = vector.extract_strided_slice %3 {offsets = [64, 0], sizes = [64, 128], strides = [1, 1]} : vector<192x128xf32> to vector<64x128xf32>
    %6 = vector.extract_strided_slice %3 {offsets = [128, 0], sizes = [64, 128], strides = [1, 1]} : vector<192x128xf32> to vector<64x128xf32>
    %c2_i32 = arith.constant 2 : i32
    %7 = tpu.dynamic_rotate %4 by %c2_i32 dim 1 : vector<64x128xf32>, i32 -> vector<64x128xf32>
    %c126_i32 = arith.constant 126 : i32
    %8 = tpu.dynamic_rotate %6 by %c126_i32 dim 1 : vector<64x128xf32>, i32 -> vector<64x128xf32>
    %9 = tpu.iota {dimensions = array<i32: 1>} : vector<1x128xi32>
    %c2_i32_4 = arith.constant 2 : i32
    %10 = vector.broadcast %c2_i32_4 : i32 to vector<1x128xi32>
    %11 = arith.cmpi slt, %9, %10 : vector<1x128xi32>
    %cst_5 = arith.constant 0.000000e+00 : f32
    %12 = vector.shape_cast %11 : vector<1x128xi1> to vector<1x128xi1>
    %13 = vector.broadcast %12 : vector<1x128xi1> to vector<64x128xi1>
    %14 = vector.broadcast %cst_5 : f32 to vector<64x128xf32>
    %15 = arith.select %13, %14, %7 : vector<64x128xi1>, vector<64x128xf32>
    %c126_i32_6 = arith.constant 126 : i32
    %16 = vector.broadcast %c126_i32_6 : i32 to vector<1x128xi32>
    %17 = arith.cmpi sge, %9, %16 : vector<1x128xi32>
    %cst_7 = arith.constant 0.000000e+00 : f32
    %18 = vector.shape_cast %17 : vector<1x128xi1> to vector<1x128xi1>
    %19 = vector.broadcast %18 : vector<1x128xi1> to vector<64x128xi1>
    %20 = vector.broadcast %cst_7 : f32 to vector<64x128xf32>
    %21 = arith.select %19, %20, %8 : vector<64x128xi1>, vector<64x128xf32>
    %22 = arith.addf %5, %15 : vector<64x128xf32>
    %23 = arith.addf %22, %21 : vector<64x128xf32>
    %c0_8 = arith.constant 0 : index
    %c0_9 = arith.constant 0 : index
    %24 = vector.load %arg5[%c0_8, %c0_9] : memref<64x1xf32, #tpu.memory_space<vmem>>, vector<64x1xf32>
    %25 = vector.broadcast %24 : vector<64x1xf32> to vector<64x128xf32>
    %26 = arith.addf %23, %25 : vector<64x128xf32>
    %cst_10 = arith.constant 0.000000e+00 : f32
    %27 = vector.broadcast %cst_10 : f32 to vector<64x128xf32>
    %28 = arith.maximumf %26, %27 : vector<64x128xf32>
    %c0_11 = arith.constant 0 : index
    %c0_12 = arith.constant 0 : index
    %29 = vector.load %arg6[%c0_11, %c0_12] : memref<64x64xf32, #tpu.memory_space<vmem>>, vector<64x64xf32>
    %cst_13 = arith.constant dense<0.000000e+00> : vector<64x128xf32>
    %30 = tpu.matmul %29, %28, %cst_13 {dimension_numbers = #tpu.dot_dimension_numbers<[1], [0], [0], [1], [0, 0, 1, 1], [], []>} : vector<64x64xf32>, vector<64x128xf32>, vector<64x128xf32> -> vector<64x128xf32>
    %c0_14 = arith.constant 0 : index
    %c0_15 = arith.constant 0 : index
    %31 = vector.load %arg7[%c0_14, %c0_15] : memref<64x1xf32, #tpu.memory_space<vmem>>, vector<64x1xf32>
    %32 = vector.broadcast %31 : vector<64x1xf32> to vector<64x128xf32>
    %33 = arith.addf %30, %32 : vector<64x128xf32>
    %34 = arith.addf %1, %33 : vector<64x128xf32>
    %c0_16 = arith.constant 0 : index
    %c0_17 = arith.constant 0 : index
    %c0_18 = arith.constant 0 : index
    %35 = vector.load %arg3[%c0_16, %c0_17, %c0_18] : memref<1x1x128xf32, #tpu.memory_space<vmem>>, vector<1x1x128xf32>
    %36 = vector.shape_cast %35 : vector<1x1x128xf32> to vector<1x128xf32>
    %37 = vector.broadcast %36 : vector<1x128xf32> to vector<64x128xf32>
    %38 = arith.mulf %34, %37 : vector<64x128xf32>
    %c0_19 = arith.constant 0 : index
    %c0_20 = arith.constant 0 : index
    %c0_21 = arith.constant 0 : index
    %39 = vector.load %arg8[%c0_19, %c0_20, %c0_21] : memref<1x64x128xf32, #tpu.memory_space<vmem>>, vector<1x64x128xf32>
    %40 = vector.shape_cast %39 : vector<1x64x128xf32> to vector<64x128xf32>
    %41 = vector.shape_cast %38 : vector<64x128xf32> to vector<1x64x128xf32>
    tpu.vector_store %arg8[%c0_19, %c0_20, %c0_21], %41 {strides = array<i32>} : memref<1x64x128xf32, #tpu.memory_space<vmem>>, vector<1x64x128xf32>,
    return
  }
  func.func @transform_0(%arg0: i32, %arg1: i32) -> (i32, i32, i32) {
    %c0_i32 = arith.constant 0 : i32
    %c0_i32_0 = arith.constant 0 : i32
    return %arg0, %c0_i32, %arg1 : i32, i32, i32
  }
  func.func @transform_1(%arg0: i32, %arg1: i32) -> (i32, i32, i32) {
    %c0_i32 = arith.constant 0 : i32
    %c0_i32_0 = arith.constant 0 : i32
    return %arg0, %c0_i32, %arg1 : i32, i32, i32
  }
  func.func @transform_2(%arg0: i32, %arg1: i32) -> (i32, i32) {
    %c0_i32 = arith.constant 0 : i32
    %c0_i32_0 = arith.constant 0 : i32
    %c0_i32_1 = arith.constant 0 : i32
    return %c0_i32, %c0_i32_0 : i32, i32
  }
  func.func @transform_3(%arg0: i32, %arg1: i32) -> (i32, i32) {
    %c0_i32 = arith.constant 0 : i32
    %c0_i32_0 = arith.constant 0 : i32
    %c0_i32_1 = arith.constant 0 : i32
    return %c0_i32, %c0_i32_0 : i32, i32
  }
  func.func @transform_4(%arg0: i32, %arg1: i32) -> (i32, i32) {
    %c0_i32 = arith.constant 0 : i32
    %c0_i32_0 = arith.constant 0 : i32
    %c0_i32_1 = arith.constant 0 : i32
    return %c0_i32, %c0_i32_0 : i32, i32
  }
  func.func @transform_5(%arg0: i32, %arg1: i32) -> (i32, i32) {
    %c0_i32 = arith.constant 0 : i32
    %c0_i32_0 = arith.constant 0 : i32
    %c0_i32_1 = arith.constant 0 : i32
    return %c0_i32, %c0_i32_0 : i32, i32
  }
  func.func @transform_6(%arg0: i32, %arg1: i32) -> (i32, i32, i32) {
    %c0_i32 = arith.constant 0 : i32
    %c0_i32_0 = arith.constant 0 : i32
    return %arg0, %c0_i32, %arg1 : i32, i32, i32
  }
}

</mosaic_0001>

<llo_original>
// kernel: tpu_custom_call.1
$region0: #{tpu_custom_call.1}
  #allocation0 [shape = 'u32[]', space=smem, size = 0x4, offset = 0x4, fixed_abs, tag = 'smem constant byte address 0x4 - core index']
  #allocation1 [shape = 'u32[144,128]{1,0:T(1,128)}', space=vmem, size = 0x12000, scoped, tag = 'internal scratch']
  %s0 = inlined_call_operand.vmem [shape: f32[2,64,128], index: 0, kind: input, shape index: {}]
  %s1 = inlined_call_operand.vmem [shape: f32[2,1,128], index: 1, kind: input, shape index: {}]
  %s2 = inlined_call_operand.vmem [shape: f32[192,64], index: 2, kind: input, shape index: {}]
  %s3 = inlined_call_operand.vmem [shape: f32[64,1], index: 3, kind: input, shape index: {}]
  %s4 = inlined_call_operand.vmem [shape: f32[64,64], index: 4, kind: input, shape index: {}]
  %s5 = inlined_call_operand.vmem [shape: f32[64,1], index: 5, kind: input, shape index: {}]
  %s6 = inlined_call_operand.hbm [shape: f32[2,64,128], index: 6, kind: output, shape index: {}]
  %s7 = sld [smem:[#allocation0]]
  $region57: #{tpu_custom_call.1} parent=0
    _
  %s9 = ssub.s32 1, %s7
  %s10 = scalar_select 0, %s9, %s7
  $region1: #{tpu_custom_call.1} parent=0
    #allocation2 [shape = 'u8[65536]{0}', space=vmem, size = 0x10000, scoped, tag = 'output window, operand 0']
    #allocation3 [shape = 's32[2]{0}', space=sflag, size = 0x8, scoped, tag = 'scoped memory for tpu_custom_call.1']
    %11 = vsyncpa [#allocation3], 0
    %s12 = scalar_lea.sflag [#allocation3], 1
    %13 = vsyncpa %s12, 0
    loop: start=0, step=1, limit=4
    $region2: #{tpu_custom_call.1} parent=1 // loop_pre_header
      _
    $region3: #{tpu_custom_call.1} parent=1 // loop_header
      %s15 = sphi 0, %s19
      %p16 = scmp.ge.s32.totalorder %s15, 4
      %s22 = sphi 0, %s34
      %s23 = sphi 0, %s30
      %s24 = sphi 0, %s22
      %s25 = sphi 0, %s23
      %s26 = sphi 0, %s24
      %s27 = sphi 0, %s25
      %s39 = sphi 0, %s41
      %s42 = sphi 0, %s39
      %s43 = sphi 0, %s42
      %s59 = sphi 0, %s43
      %s67 = sphi 0, %s69
      %s70 = sphi 0, %s67
      %s71 = sphi 0, %s70
      %s87 = sphi 0, %s71
      %s91 = sphi 0, %s91
      %s93 = sphi 0, %s91
      %s94 = sphi 0, %s93
      %s108 = sphi 0, %s94
      %s112 = sphi 0, %s112
      %s114 = sphi 0, %s112
      %s115 = sphi 0, %s114
      %s129 = sphi 0, %s115
      %s133 = sphi 0, %s133
      %s135 = sphi 0, %s133
      %s136 = sphi 0, %s135
      %s150 = sphi 0, %s136
      %s154 = sphi 0, %s154
      %s156 = sphi 0, %s154
      %s157 = sphi 0, %s156
      %s171 = sphi 0, %s157
      %s179 = sphi 0, %s181
      %s182 = sphi 0, %s179
      %s183 = sphi 0, %s182
      %s199 = sphi 0, %s183
    $region4: #{tpu_custom_call.1} parent=1 // loop_header_branch
      %18 = sbr.rel (%p16) target = $region8
    $region5: #{tpu_custom_call.1} parent=1 // loop_body
      %s20 = ssub.s32 %s15, 1
      %s21 = ssub.s32 %s15, 2
      %s28 = sadd.s32 1, %s23
      %p29 = scmp.ge.s32.totalorder %s28, 1
      %s30 = scalar_select %p29, 0, %s28
      %s31 = sadd.s32 1, %s22
      %s32 = scalar_select %p29, %s31, %s22
      %p33 = scmp.ge.s32.totalorder %s32, 2
      %s34 = scalar_select %p33, 0, %s32
      %s35 = ssub.s32 %s22, %s34
      %s36 = ssub.s32 %s23, %s30
      %s37 = sor.u32 %s35, %s36
      %p38 = scmp.eq.s32.totalorder %s37, 0
      %s40 = sadd.s32 %s39, 1
      %s41 = scalar_select %p38, %s39, %s40
      %p44 = pneg %p38
      %p45 = scmp.eq.s32.totalorder %s15, 1
      %p46 = por %p44, %p45
      %p47 = scmp.ne.s32.totalorder %s39, %s42
      %p48 = scmp.eq.s32.totalorder %s15, 0
      %p49 = por %p47, %p48
      %p50 = scmp.ne.s32.totalorder %s39, %s42
      %p51 = scmp.eq.s32.totalorder %s20, 1
      %p52 = por %p50, %p51
      %p53 = scmp.ne.s32.totalorder %s42, %s43
      %p54 = scmp.eq.s32.totalorder %s20, 0
      %p55 = por %p53, %p54
      %p56 = scmp.ne.s32.totalorder %s42, %s43
      %p57 = scmp.eq.s32.totalorder %s21, 1
      %p58 = por %p56, %p57
      %p60 = scmp.ne.s32.totalorder %s43, %s59
      %p61 = scmp.eq.s32.totalorder %s21, 0
      %p62 = por %p60, %p61
      %s63 = ssub.s32 %s22, %s34
      %s64 = ssub.s32 %s23, %s30
      %s65 = sor.u32 %s63, %s64
      %p66 = scmp.eq.s32.totalorder %s65, 0
      %s68 = sadd.s32 %s67, 1
      %s69 = scalar_select %p66, %s67, %s68
      %p72 = pneg %p66
      %p73 = scmp.eq.s32.totalorder %s15, 1
      %p74 = por %p72, %p73
      %p75 = scmp.ne.s32.totalorder %s67, %s70
      %p76 = scmp.eq.s32.totalorder %s15, 0
      %p77 = por %p75, %p76
      %p78 = scmp.ne.s32.totalorder %s67, %s70
      %p79 = scmp.eq.s32.totalorder %s20, 1
      %p80 = por %p78, %p79
      %p81 = scmp.ne.s32.totalorder %s70, %s71
      %p82 = scmp.eq.s32.totalorder %s20, 0
      %p83 = por %p81, %p82
      %p84 = scmp.ne.s32.totalorder %s70, %s71
      %p85 = scmp.eq.s32.totalorder %s21, 1
      %p86 = por %p84, %p85
      %p88 = scmp.ne.s32.totalorder %s71, %s87
      %p89 = scmp.eq.s32.totalorder %s21, 0
      %p90 = por %p88, %p89
      %s92 = sadd.s32 %s91, 1
      %p95 = scmp.eq.s32.totalorder %s15, 1
      %p96 = scmp.ne.s32.totalorder %s91, %s93
      %p97 = scmp.eq.s32.totalorder %s15, 0
      %p98 = por %p96, %p97
      %p99 = scmp.ne.s32.totalorder %s91, %s93
      %p100 = scmp.eq.s32.totalorder %s20, 1
      %p101 = por %p99, %p100
      %p102 = scmp.ne.s32.totalorder %s93, %s94
      %p103 = scmp.eq.s32.totalorder %s20, 0
      %p104 = por %p102, %p103
      %p105 = scmp.ne.s32.totalorder %s93, %s94
      %p106 = scmp.eq.s32.totalorder %s21, 1
      %p107 = por %p105, %p106
      %p109 = scmp.ne.s32.totalorder %s94, %s108
      %p110 = scmp.eq.s32.totalorder %s21, 0
      %p111 = por %p109, %p110
      %s113 = sadd.s32 %s112, 1
      %p116 = scmp.eq.s32.totalorder %s15, 1
      %p117 = scmp.ne.s32.totalorder %s112, %s114
      %p118 = scmp.eq.s32.totalorder %s15, 0
      %p119 = por %p117, %p118
      %p120 = scmp.ne.s32.totalorder %s112, %s114
      %p121 = scmp.eq.s32.totalorder %s20, 1
      %p122 = por %p120, %p121
      %p123 = scmp.ne.s32.totalorder %s114, %s115
      %p124 = scmp.eq.s32.totalorder %s20, 0
      %p125 = por %p123, %p124
      %p126 = scmp.ne.s32.totalorder %s114, %s115
      %p127 = scmp.eq.s32.totalorder %s21, 1
      %p128 = por %p126, %p127
      %p130 = scmp.ne.s32.totalorder %s115, %s129
      %p131 = scmp.eq.s32.totalorder %s21, 0
      %p132 = por %p130, %p131
      %s134 = sadd.s32 %s133, 1
      %p137 = scmp.eq.s32.totalorder %s15, 1
      %p138 = scmp.ne.s32.totalorder %s133, %s135
      %p139 = scmp.eq.s32.totalorder %s15, 0
      %p140 = por %p138, %p139
      %p141 = scmp.ne.s32.totalorder %s133, %s135
      %p142 = scmp.eq.s32.totalorder %s20, 1
      %p143 = por %p141, %p142
      %p144 = scmp.ne.s32.totalorder %s135, %s136
      %p145 = scmp.eq.s32.totalorder %s20, 0
      %p146 = por %p144, %p145
      %p147 = scmp.ne.s32.totalorder %s135, %s136
      %p148 = scmp.eq.s32.totalorder %s21, 1
      %p149 = por %p147, %p148
      %p151 = scmp.ne.s32.totalorder %s136, %s150
      %p152 = scmp.eq.s32.totalorder %s21, 0
      %p153 = por %p151, %p152
      %s155 = sadd.s32 %s154, 1
      %p158 = scmp.eq.s32.totalorder %s15, 1
      %p159 = scmp.ne.s32.totalorder %s154, %s156
      %p160 = scmp.eq.s32.totalorder %s15, 0
      %p161 = por %p159, %p160
      %p162 = scmp.ne.s32.totalorder %s154, %s156
      %p163 = scmp.eq.s32.totalorder %s20, 1
      %p164 = por %p162, %p163
      %p165 = scmp.ne.s32.totalorder %s156, %s157
      %p166 = scmp.eq.s32.totalorder %s20, 0
      %p167 = por %p165, %p166
      %p168 = scmp.ne.s32.totalorder %s156, %s157
      %p169 = scmp.eq.s32.totalorder %s21, 1
      %p170 = por %p168, %p169
      %p172 = scmp.ne.s32.totalorder %s157, %s171
      %p173 = scmp.eq.s32.totalorder %s21, 0
      %p174 = por %p172, %p173
      %s175 = ssub.s32 %s22, %s34
      %s176 = ssub.s32 %s23, %s30
      %s177 = sor.u32 %s175, %s176
      %p178 = scmp.eq.s32.totalorder %s177, 0
      %s180 = sadd.s32 %s179, 1
      %s181 = scalar_select %p178, %s179, %s180
      %p184 = pneg %p178
      %p185 = scmp.eq.s32.totalorder %s15, 1
      %p186 = por %p184, %p185
      %p187 = scmp.ne.s32.totalorder %s179, %s182
      %p188 = scmp.eq.s32.totalorder %s15, 0
      %p189 = por %p187, %p188
      %p190 = scmp.ne.s32.totalorder %s179, %s182
      %p191 = scmp.eq.s32.totalorder %s20, 1
      %p192 = por %p190, %p191
      %p193 = scmp.ne.s32.totalorder %s182, %s183
      %p194 = scmp.eq.s32.totalorder %s20, 0
      %p195 = por %p193, %p194
      %p196 = scmp.ne.s32.totalorder %s182, %s183
      %p197 = scmp.eq.s32.totalorder %s21, 1
      %p198 = por %p196, %p197
      %p200 = scmp.ne.s32.totalorder %s183, %s199
      %p201 = scmp.eq.s32.totalorder %s21, 0
      %p202 = por %p200, %p201
      %p203 = scmp.le.s32.totalorder 1, %s15
      %p204 = scmp.lt.s32.totalorder %s15, 3
      %p205 = pnand %p203, %p204
      %p206 = pneg %p205
      // Predicated region
      $region9: #{tpu_custom_call.1} parent=5 // pred_check
        _
      $region10: #{tpu_custom_call.1} parent=5 // pred_check_branch
        %208 = sbr.rel (%p205) target = $region12
      $region11: #{tpu_custom_call.1} parent=5 // pred_region
        %s209 = ssub.s32 %s15, 1
        // Predicated region
        $region13: #{tpu_custom_call.1} parent=11 // pred_check
          %p210 = pneg %p104
        $region14: #{tpu_custom_call.1} parent=11 // pred_check_branch
          %212 = sbr.rel (%p210) target = $region16
        $region15: #{tpu_custom_call.1} parent=11 // pred_region
          _
        $region16: #{tpu_custom_call.1} parent=11 // pred_fallthru
          _
        // Predicated region
        $region17: #{tpu_custom_call.1} parent=11 // pred_check
          %p213 = pneg %p125
        $region18: #{tpu_custom_call.1} parent=11 // pred_check_branch
          %215 = sbr.rel (%p213) target = $region20
        $region19: #{tpu_custom_call.1} parent=11 // pred_region
          _
        $region20: #{tpu_custom_call.1} parent=11 // pred_fallthru
          _
        // Predicated region
        $region21: #{tpu_custom_call.1} parent=11 // pred_check
          %p216 = pneg %p146
        $region22: #{tpu_custom_call.1} parent=11 // pred_check_branch
          %218 = sbr.rel (%p216) target = $region24
        $region23: #{tpu_custom_call.1} parent=11 // pred_region
          _
        $region24: #{tpu_custom_call.1} parent=11 // pred_fallthru
          _
        // Predicated region
        $region25: #{tpu_custom_call.1} parent=11 // pred_check
          %p219 = pneg %p167
        $region26: #{tpu_custom_call.1} parent=11 // pred_check_branch
          %221 = sbr.rel (%p219) target = $region28
        $region27: #{tpu_custom_call.1} parent=11 // pred_region
          _
        $region28: #{tpu_custom_call.1} parent=11 // pred_fallthru
          _
      $region12: #{tpu_custom_call.1} parent=5 // pred_fallthru
        _
      %p222 = scmp.lt.s32.totalorder %s15, 2
      // Predicated region
      $region29: #{tpu_custom_call.1} parent=5 // pred_check
        %p223 = pneg %p222
      $region30: #{tpu_custom_call.1} parent=5 // pred_check_branch
        %225 = sbr.rel (%p223) target = $region32
      $region31: #{tpu_custom_call.1} parent=5 // pred_region
        // Predicated region
        $region33: #{tpu_custom_call.1} parent=31 // pred_check
          %p226 = pneg %p49
        $region34: #{tpu_custom_call.1} parent=31 // pred_check_branch
          %228 = sbr.rel (%p226) target = $region36
        $region35: #{tpu_custom_call.1} parent=31 // pred_region
          %p229 = scmp.lt.s32.totalorder %s22, 1
          %s230 = scalar_select %p229, %s22, 1
          %p231 = scmp.lt.s32.totalorder %s23, 0
          %s232 = scalar_select %p231, %s23, 0
          %s233 = smul.addr %s230, 8
          %s234 = sadd.s32 %s232, %s233
          %s235 = smul.addr %s234, 8
          %s236 = scalar_lea.vmem %s0, %s235
        $region36: #{tpu_custom_call.1} parent=31 // pred_fallthru
          _
        // Predicated region
        $region37: #{tpu_custom_call.1} parent=31 // pred_check
          %p237 = pneg %p77
        $region38: #{tpu_custom_call.1} parent=31 // pred_check_branch
          %239 = sbr.rel (%p237) target = $region40
        $region39: #{tpu_custom_call.1} parent=31 // pred_region
          %p240 = scmp.lt.s32.totalorder %s22, 1
          %s241 = scalar_select %p240, %s22, 1
          %p242 = scmp.lt.s32.totalorder %s23, 0
          %s243 = scalar_select %p242, %s23, 0
          %s244 = sadd.s32 %s243, %s241
          %s245 = scalar_lea.vmem %s1, %s244
        $region40: #{tpu_custom_call.1} parent=31 // pred_fallthru
          _
      $region32: #{tpu_custom_call.1} parent=5 // pred_fallthru
        _
      %p246 = scmp.le.s32.totalorder 1, %s15
      %p247 = scmp.lt.s32.totalorder %s15, 3
      %p248 = pnand %p246, %p247
      %p249 = pneg %p248
      // Predicated region
      $region41: #{tpu_custom_call.1} parent=5 // pred_check
        _
      $region42: #{tpu_custom_call.1} parent=5 // pred_check_branch
        %251 = sbr.rel (%p248) target = $region44
      $region43: #{tpu_custom_call.1} parent=5 // pred_region
        %s252 = ssub.s32 %s15, 1
        %p253 = scmp.lt.s32.totalorder %s24, 1
        %s254 = scalar_select %p253, %s24, 1
        %p255 = scmp.lt.s32.totalorder %s25, 0
        %s256 = scalar_select %p255, %s25, 0
        %s257 = smul.addr %s254, 8
        %s258 = sadd.s32 %s256, %s257
        %s259 = smul.addr %s258, 8
        %s260 = scalar_lea.vmem %s0, %s259
        %p261 = pneg %p55
        %p262 = pneg %p52
        %p263 = scmp.lt.s32.totalorder %s24, 1
        %s264 = scalar_select %p263, %s24, 1
        %p265 = scmp.lt.s32.totalorder %s25, 0
        %s266 = scalar_select %p265, %s25, 0
        %s267 = sadd.s32 %s266, %s264
        %s268 = scalar_lea.vmem %s1, %s267
        %p269 = pneg %p83
        %p270 = pneg %p80
        %p271 = pneg %p104
        %p272 = pneg %p101
        %p273 = pneg %p125
        %p274 = pneg %p122
        %p275 = pneg %p146
        %p276 = pneg %p143
        %p277 = pneg %p167
        %p278 = pneg %p164
        %p279 = pneg %p195
        %p280 = pneg %p192
        %s281 = sand.u32 %s182, 1
        %s282 = scalar_lea.sflag [#allocation3], %s281
        %s283 = sand.u32 %s182, 1
        %s284 = smul.addr %s283, 64
        %s285 = scalar_lea.vmem [#allocation2], %s284
        %p286 = scmp.lt.s32.totalorder %s24, 1
        %s287 = scalar_select %p286, %s24, 1
        %p288 = scmp.lt.s32.totalorder %s25, 0
        %s289 = scalar_select %p288, %s25, 0
        %s290 = smul.addr %s287, 8
        %s291 = sadd.s32 %s289, %s290
        %s292 = smul.addr %s291, 8
        %s293 = scalar_lea.vmem %s0, %s292
        %p294 = scmp.lt.s32.totalorder %s24, 1
        %s295 = scalar_select %p294, %s24, 1
        %p296 = scmp.lt.s32.totalorder %s25, 0
        %s297 = scalar_select %p296, %s25, 0
        %s298 = sadd.s32 %s297, %s295
        %s299 = scalar_lea.vmem %s1, %s298
        %v300 = vld [vmem:[%s293] sm:$0xff]
        %v301 = vld [vmem:[%s293 + $0x8] sm:$0xff]
        %v302 = vld [vmem:[%s293 + $0x10] sm:$0xff]
        %v303 = vld [vmem:[%s293 + $0x18] sm:$0xff]
        %v304 = vld [vmem:[%s293 + $0x20] sm:$0xff]
        %v305 = vld [vmem:[%s293 + $0x28] sm:$0xff]
        %v306 = vld [vmem:[%s293 + $0x30] sm:$0xff]
        %v307 = vld [vmem:[%s293 + $0x38] sm:$0xff]
        %v308 = vld [vmem:[%s2] sm:$0xff]
        %v309 = vld [vmem:[%s2 + $0x8] sm:$0xff]
        %v310 = vld [vmem:[%s2 + $0x10] sm:$0xff]
        %v311 = vld [vmem:[%s2 + $0x18] sm:$0xff]
        %v312 = vld [vmem:[%s2 + $0x20] sm:$0xff]
        %v313 = vld [vmem:[%s2 + $0x28] sm:$0xff]
        %v314 = vld [vmem:[%s2 + $0x30] sm:$0xff]
        %v315 = vld [vmem:[%s2 + $0x38] sm:$0xff]
        %v316 = vld [vmem:[%s2 + $0x40] sm:$0xff]
        %v317 = vld [vmem:[%s2 + $0x48] sm:$0xff]
        %v318 = vld [vmem:[%s2 + $0x50] sm:$0xff]
        %v319 = vld [vmem:[%s2 + $0x58] sm:$0xff]
        %v320 = vld [vmem:[%s2 + $0x60] sm:$0xff]
        %v321 = vld [vmem:[%s2 + $0x68] sm:$0xff]
        %v322 = vld [vmem:[%s2 + $0x70] sm:$0xff]
        %v323 = vld [vmem:[%s2 + $0x78] sm:$0xff]
        %v324 = vld [vmem:[%s2 + $0x80] sm:$0xff]
        %v325 = vld [vmem:[%s2 + $0x88] sm:$0xff]
        %v326 = vld [vmem:[%s2 + $0x90] sm:$0xff]
        %v327 = vld [vmem:[%s2 + $0x98] sm:$0xff]
        %v328 = vld [vmem:[%s2 + $0xa0] sm:$0xff]
        %v329 = vld [vmem:[%s2 + $0xa8] sm:$0xff]
        %v330 = vld [vmem:[%s2 + $0xb0] sm:$0xff]
        %v331 = vld [vmem:[%s2 + $0xb8] sm:$0xff]
        %vm332 = vcmask 523264
        %v334 = vsel %vm332, %v308, 0
        %v337 = vsel %vm332, %v309, 0
        %v340 = vsel %vm332, %v310, 0
        %v343 = vsel %vm332, %v311, 0
        %v346 = vsel %vm332, %v312, 0
        %v349 = vsel %vm332, %v313, 0
        %v352 = vsel %vm332, %v314, 0
        %v355 = vsel %vm332, %v315, 0
        %v358 = vsel %vm332, %v316, 0
        %v361 = vsel %vm332, %v317, 0
        %v364 = vsel %vm332, %v318, 0
        %v367 = vsel %vm332, %v319, 0
        %v370 = vsel %vm332, %v320, 0
        %v373 = vsel %vm332, %v321, 0
        %v376 = vsel %vm332, %v322, 0
        %v379 = vsel %vm332, %v323, 0
        %v382 = vsel %vm332, %v324, 0
        %v385 = vsel %vm332, %v325, 0
        %v388 = vsel %vm332, %v326, 0
        %v391 = vsel %vm332, %v327, 0
        %v394 = vsel %vm332, %v328, 0
        %v397 = vsel %vm332, %v329, 0
        %v400 = vsel %vm332, %v330, 0
        %v403 = vsel %vm332, %v331, 0
        %405 = vmatprep.subr.mxu0 0.0
        %406 = vmatpush1.msra.mxu0 0.0
        %407 = vmatprep.subr.mxu0 0.0
        %408 = vmatpush1.msra.mxu0 0.0
        %409 = vmatprep.subr.mxu0 0.0
        %410 = vmatpush1.msra.mxu0 0.0
        %411 = vmatprep.subr.mxu0 0.0
        %412 = vmatpush1.msra.mxu0 0.0
        %413 = vmatprep.subr.mxu0 0.0
        %414 = vmatpush1.msra.mxu0 0.0
        %415 = vmatprep.subr.mxu0 0.0
        %416 = vmatpush1.msra.mxu0 0.0
        %417 = vmatprep.subr.mxu0 0.0
        %418 = vmatpush1.msra.mxu0 0.0
        %419 = vmatprep.subr.mxu0 0.0
        %420 = vmatpush1.msra.mxu0 0.0
        %421 = vmatprep.subr.mxu0 0.0
        %422 = vmatpush1.msra.mxu0 %v307
        %423 = vmatprep.subr.mxu0 0.0
        %424 = vmatpush1.msra.mxu0 %v306
        %425 = vmatprep.subr.mxu0 0.0
        %426 = vmatpush1.msra.mxu0 %v305
        %427 = vmatprep.subr.mxu0 0.0
        %428 = vmatpush1.msra.mxu0 %v304
        %429 = vmatprep.subr.mxu0 0.0
        %430 = vmatpush1.msra.mxu0 %v303
        %431 = vmatprep.subr.mxu0 0.0
        %432 = vmatpush1.msra.mxu0 %v302
        %433 = vmatprep.subr.mxu0 0.0
        %434 = vmatpush1.msra.mxu0 %v301
        %435 = vmatprep.subr.mxu0 0.0
        %436 = vmatpush1.msra.mxu0 %v300
        %437 = vmatprep.subr.mxu0 0.0
        %438 = vmatpush2.msra.mxu0 0.0
        %439 = vmatprep.subr.mxu0 0.0
        %440 = vmatpush2.msra.mxu0 0.0
        %441 = vmatprep.subr.mxu0 0.0
        %442 = vmatpush2.msra.mxu0 0.0
        %443 = vmatprep.subr.mxu0 0.0
        %444 = vmatpush2.msra.mxu0 0.0
        %445 = vmatprep.subr.mxu0 0.0
        %446 = vmatpush2.msra.mxu0 0.0
        %447 = vmatprep.subr.mxu0 0.0
        %448 = vmatpush2.msra.mxu0 0.0
        %449 = vmatprep.subr.mxu0 0.0
        %450 = vmatpush2.msra.mxu0 0.0
        %451 = vmatprep.subr.mxu0 0.0
        %452 = vmatpush2.msra.mxu0 0.0
        %453 = vmatprep.subr.mxu0 0.0
        %454 = vmatpush2.msra.mxu0 0.0
        %455 = vmatprep.subr.mxu0 0.0
        %456 = vmatpush2.msra.mxu0 0.0
        %457 = vmatprep.subr.mxu0 0.0
        %458 = vmatpush2.msra.mxu0 0.0
        %459 = vmatprep.subr.mxu0 0.0
        %460 = vmatpush2.msra.mxu0 0.0
        %461 = vmatprep.subr.mxu0 0.0
        %462 = vmatpush2.msra.mxu0 0.0
        %463 = vmatprep.subr.mxu0 0.0
        %464 = vmatpush2.msra.mxu0 0.0
        %465 = vmatprep.subr.mxu0 0.0
        %466 = vmatpush2.msra.mxu0 0.0
        %467 = vmatprep.subr.mxu0 0.0
        %468 = vmatpush2.msra.mxu0 0.0
        %469 = vmatprep.mubr.f32.mxu0 0.0
        %470 = vmatmul.mubr.f32.gmra.mxu0 %v334
        %v471 = vpop.f32.mrf.mxu0
        %v472 = vadd.f32 0.0, %v471
        %v473 = vpop.f32.mrf.mxu0
        %474 = vmatprep.mubr.f32.mxu0 0.0
        %475 = vmatmul.mubr.f32.gmra.mxu0 %v337
        %v476 = vpop.f32.mrf.mxu0
        %v477 = vadd.f32 0.0, %v476
        %v478 = vpop.f32.mrf.mxu0
        %479 = vmatprep.mubr.f32.mxu0 0.0
        %480 = vmatmul.mubr.f32.gmra.mxu0 %v340
        %v481 = vpop.f32.mrf.mxu0
        %v482 = vadd.f32 0.0, %v481
        %v483 = vpop.f32.mrf.mxu0
        %484 = vmatprep.mubr.f32.mxu0 0.0
        %485 = vmatmul.mubr.f32.gmra.mxu0 %v343
        %v486 = vpop.f32.mrf.mxu0
        %v487 = vadd.f32 0.0, %v486
        %v488 = vpop.f32.mrf.mxu0
        %489 = vmatprep.mubr.f32.mxu0 0.0
        %490 = vmatmul.mubr.f32.gmra.mxu0 %v346
        %v491 = vpop.f32.mrf.mxu0
        %v492 = vadd.f32 0.0, %v491
        %v493 = vpop.f32.mrf.mxu0
        %494 = vmatprep.mubr.f32.mxu0 0.0
        %495 = vmatmul.mubr.f32.gmra.mxu0 %v349
        %v496 = vpop.f32.mrf.mxu0
        %v497 = vadd.f32 0.0, %v496
        %v498 = vpop.f32.mrf.mxu0
        %499 = vmatprep.mubr.f32.mxu0 0.0
        %500 = vmatmul.mubr.f32.gmra.mxu0 %v352
        %v501 = vpop.f32.mrf.mxu0
        %v502 = vadd.f32 0.0, %v501
        %v503 = vpop.f32.mrf.mxu0
        %504 = vmatprep.mubr.f32.mxu0 0.0
        %505 = vmatmul.mubr.f32.gmra.mxu0 %v355
        %v506 = vpop.f32.mrf.mxu0
        %v507 = vadd.f32 0.0, %v506
        %v508 = vpop.f32.mrf.mxu0
        %509 = vmatprep.mubr.f32.mxu0 0.0
        %510 = vmatmul.mubr.f32.gmra.mxu0 %v358
        %v511 = vpop.f32.mrf.mxu0
        %v512 = vadd.f32 0.0, %v511
        %v513 = vpop.f32.mrf.mxu0
        %514 = vmatprep.mubr.f32.mxu0 0.0
        %515 = vmatmul.mubr.f32.gmra.mxu0 %v361
        %v516 = vpop.f32.mrf.mxu0
        %v517 = vadd.f32 0.0, %v516
        %v518 = vpop.f32.mrf.mxu0
        %519 = vmatprep.mubr.f32.mxu0 0.0
        %520 = vmatmul.mubr.f32.gmra.mxu0 %v364
        %v521 = vpop.f32.mrf.mxu0
        %v522 = vadd.f32 0.0, %v521
        %v523 = vpop.f32.mrf.mxu0
        %524 = vmatprep.mubr.f32.mxu0 0.0
        %525 = vmatmul.mubr.f32.gmra.mxu0 %v367
        %v526 = vpop.f32.mrf.mxu0
        %v527 = vadd.f32 0.0, %v526
        %v528 = vpop.f32.mrf.mxu0
        %529 = vmatprep.mubr.f32.mxu0 0.0
        %530 = vmatmul.mubr.f32.gmra.mxu0 %v370
        %v531 = vpop.f32.mrf.mxu0
        %v532 = vadd.f32 0.0, %v531
        %v533 = vpop.f32.mrf.mxu0
        %534 = vmatprep.mubr.f32.mxu0 0.0
        %535 = vmatmul.mubr.f32.gmra.mxu0 %v373
        %v536 = vpop.f32.mrf.mxu0
        %v537 = vadd.f32 0.0, %v536
        %v538 = vpop.f32.mrf.mxu0
        %539 = vmatprep.mubr.f32.mxu0 0.0
        %540 = vmatmul.mubr.f32.gmra.mxu0 %v376
        %v541 = vpop.f32.mrf.mxu0
        %v542 = vadd.f32 0.0, %v541
        %v543 = vpop.f32.mrf.mxu0
        %544 = vmatprep.mubr.f32.mxu0 0.0
        %545 = vmatmul.mubr.f32.gmra.mxu0 %v379
        %v546 = vpop.f32.mrf.mxu0
        %v547 = vadd.f32 0.0, %v546
        %v548 = vpop.f32.mrf.mxu0
        %549 = vmatprep.mubr.f32.mxu0 0.0
        %550 = vmatmul.mubr.f32.gmra.mxu0 %v382
        %v551 = vpop.f32.mrf.mxu0
        %v552 = vadd.f32 0.0, %v551
        %v553 = vpop.f32.mrf.mxu0
        %554 = vmatprep.mubr.f32.mxu0 0.0
        %555 = vmatmul.mubr.f32.gmra.mxu0 %v385
        %v556 = vpop.f32.mrf.mxu0
        %v557 = vadd.f32 0.0, %v556
        %v558 = vpop.f32.mrf.mxu0
        %559 = vmatprep.mubr.f32.mxu0 0.0
        %560 = vmatmul.mubr.f32.gmra.mxu0 %v388
        %v561 = vpop.f32.mrf.mxu0
        %v562 = vadd.f32 0.0, %v561
        %v563 = vpop.f32.mrf.mxu0
        %564 = vmatprep.mubr.f32.mxu0 0.0
        %565 = vmatmul.mubr.f32.gmra.mxu0 %v391
        %v566 = vpop.f32.mrf.mxu0
        %v567 = vadd.f32 0.0, %v566
        %v568 = vpop.f32.mrf.mxu0
        %569 = vmatprep.mubr.f32.mxu0 0.0
        %570 = vmatmul.mubr.f32.gmra.mxu0 %v394
        %v571 = vpop.f32.mrf.mxu0
        %v572 = vadd.f32 0.0, %v571
        %v573 = vpop.f32.mrf.mxu0
        %574 = vmatprep.mubr.f32.mxu0 0.0
        %575 = vmatmul.mubr.f32.gmra.mxu0 %v397
        %v576 = vpop.f32.mrf.mxu0
        %v577 = vadd.f32 0.0, %v576
        %v578 = vpop.f32.mrf.mxu0
        %579 = vmatprep.mubr.f32.mxu0 0.0
        %580 = vmatmul.mubr.f32.gmra.mxu0 %v400
        %v581 = vpop.f32.mrf.mxu0
        %v582 = vadd.f32 0.0, %v581
        %v583 = vpop.f32.mrf.mxu0
        %584 = vmatprep.mubr.f32.mxu0 0.0
        %585 = vmatmul.mubr.f32.gmra.mxu0 %v403
        %v586 = vpop.f32.mrf.mxu0
        %v587 = vadd.f32 0.0, %v586
        %v588 = vpop.f32.mrf.mxu0
        %589 = vdwg.mxu0
        %590 = vrot.lane.b32.xlu0 %v472, 2
        %v591 = vpop.permute.xlu0 %590
        %592 = vrot.lane.b32.xlu0 %v477, 2
        %v593 = vpop.permute.xlu0 %592
        %594 = vrot.lane.b32.xlu0 %v482, 2
        %v595 = vpop.permute.xlu0 %594
        %596 = vrot.lane.b32.xlu0 %v487, 2
        %v597 = vpop.permute.xlu0 %596
        %598 = vrot.lane.b32.xlu0 %v492, 2
        %v599 = vpop.permute.xlu0 %598
        %600 = vrot.lane.b32.xlu0 %v497, 2
        %v601 = vpop.permute.xlu0 %600
        %602 = vrot.lane.b32.xlu0 %v502, 2
        %v603 = vpop.permute.xlu0 %602
        %604 = vrot.lane.b32.xlu0 %v507, 2
        %v605 = vpop.permute.xlu0 %604
        %606 = vrot.lane.b32.xlu0 %v552, 126
        %v607 = vpop.permute.xlu0 %606
        %608 = vrot.lane.b32.xlu0 %v557, 126
        %v609 = vpop.permute.xlu0 %608
        %610 = vrot.lane.b32.xlu0 %v562, 126
        %v611 = vpop.permute.xlu0 %610
        %612 = vrot.lane.b32.xlu0 %v567, 126
        %v613 = vpop.permute.xlu0 %612
        %614 = vrot.lane.b32.xlu0 %v572, 126
        %v615 = vpop.permute.xlu0 %614
        %616 = vrot.lane.b32.xlu0 %v577, 126
        %v617 = vpop.permute.xlu0 %616
        %618 = vrot.lane.b32.xlu0 %v582, 126
        %v619 = vpop.permute.xlu0 %618
        %620 = vrot.lane.b32.xlu0 %v587, 126
        %v621 = vpop.permute.xlu0 %620
        %v622 = vlaneseq
        %v623 = vand.u32 %v622, 127
        %vm624 = vcmp.lt.s32.totalorder %v623, 2
        %v625 = vsel %vm624, 1, 0
        %vm626 = vcmp.eq.s32.totalorder %v625, 1
        %v627 = vsel %vm626, 0.0, %v591
        %v628 = vsel %vm626, 0.0, %v593
        %v629 = vsel %vm626, 0.0, %v595
        %v630 = vsel %vm626, 0.0, %v597
        %v631 = vsel %vm626, 0.0, %v599
        %v632 = vsel %vm626, 0.0, %v601
        %v633 = vsel %vm626, 0.0, %v603
        %v634 = vsel %vm626, 0.0, %v605
        %vm635 = vcmp.ge.s32.totalorder %v623, 126
        %v636 = vsel %vm635, 1, 0
        %vm637 = vcmp.eq.s32.totalorder %v636, 1
        %v638 = vsel %vm637, 0.0, %v607
        %v639 = vsel %vm637, 0.0, %v609
        %v640 = vsel %vm637, 0.0, %v611
        %v641 = vsel %vm637, 0.0, %v613
        %v642 = vsel %vm637, 0.0, %v615
        %v643 = vsel %vm637, 0.0, %v617
        %v644 = vsel %vm637, 0.0, %v619
        %v645 = vsel %vm637, 0.0, %v621
        %v646 = vadd.f32 %v512, %v627
        %v647 = vadd.f32 %v517, %v628
        %v648 = vadd.f32 %v522, %v629
        %v649 = vadd.f32 %v527, %v630
        %v650 = vadd.f32 %v532, %v631
        %v651 = vadd.f32 %v537, %v632
        %v652 = vadd.f32 %v542, %v633
        %v653 = vadd.f32 %v547, %v634
        %v654 = vadd.f32 %v646, %v638
        %v655 = vadd.f32 %v647, %v639
        %v656 = vadd.f32 %v648, %v640
        %v657 = vadd.f32 %v649, %v641
        %v658 = vadd.f32 %v650, %v642
        %v659 = vadd.f32 %v651, %v643
        %v660 = vadd.f32 %v652, %v644
        %v661 = vadd.f32 %v653, %v645
        %v662 = vld [vmem:[%s3] sm:$0xff]
        %v663 = vld [vmem:[%s3 + $0x8] sm:$0xff]
        %v664 = vld [vmem:[%s3 + $0x10] sm:$0xff]
        %v665 = vld [vmem:[%s3 + $0x18] sm:$0xff]
        %v666 = vld [vmem:[%s3 + $0x20] sm:$0xff]
        %v667 = vld [vmem:[%s3 + $0x28] sm:$0xff]
        %v668 = vld [vmem:[%s3 + $0x30] sm:$0xff]
        %v669 = vld [vmem:[%s3 + $0x38] sm:$0xff]
        %671 = vset.pattern.permute.xlu0 0
        %672 = vperm.xlu0 %671, %v662
        %v673 = vpop.permute.xlu0 %672
        %676 = vset.pattern.permute.xlu0 0
        %677 = vperm.xlu0 %676, %v663
        %v678 = vpop.permute.xlu0 %677
        %681 = vset.pattern.permute.xlu0 0
        %682 = vperm.xlu0 %681, %v664
        %v683 = vpop.permute.xlu0 %682
        %686 = vset.pattern.permute.xlu0 0
        %687 = vperm.xlu0 %686, %v665
        %v688 = vpop.permute.xlu0 %687
        %691 = vset.pattern.permute.xlu0 0
        %692 = vperm.xlu0 %691, %v666
        %v693 = vpop.permute.xlu0 %692
        %696 = vset.pattern.permute.xlu0 0
        %697 = vperm.xlu0 %696, %v667
        %v698 = vpop.permute.xlu0 %697
        %701 = vset.pattern.permute.xlu0 0
        %702 = vperm.xlu0 %701, %v668
        %v703 = vpop.permute.xlu0 %702
        %706 = vset.pattern.permute.xlu0 0
        %707 = vperm.xlu0 %706, %v669
        %v708 = vpop.permute.xlu0 %707
        %v710 = vadd.f32 %v654, %v673
        %v711 = vadd.f32 %v655, %v678
        %v712 = vadd.f32 %v656, %v683
        %v713 = vadd.f32 %v657, %v688
        %v714 = vadd.f32 %v658, %v693
        %v715 = vadd.f32 %v659, %v698
        %v716 = vadd.f32 %v660, %v703
        %v717 = vadd.f32 %v661, %v708
        %v718 = vmax.f32 %v710, 0.0
        %v719 = vmax.f32 %v711, 0.0
        %v720 = vmax.f32 %v712, 0.0
        %v721 = vmax.f32 %v713, 0.0
        %v722 = vmax.f32 %v714, 0.0
        %v723 = vmax.f32 %v715, 0.0
        %v724 = vmax.f32 %v716, 0.0
        %v725 = vmax.f32 %v717, 0.0
        %v726 = vld [vmem:[%s4] sm:$0xff]
        %v727 = vld [vmem:[%s4 + $0x8] sm:$0xff]
        %v728 = vld [vmem:[%s4 + $0x10] sm:$0xff]
        %v729 = vld [vmem:[%s4 + $0x18] sm:$0xff]
        %v730 = vld [vmem:[%s4 + $0x20] sm:$0xff]
        %v731 = vld [vmem:[%s4 + $0x28] sm:$0xff]
        %v732 = vld [vmem:[%s4 + $0x30] sm:$0xff]
        %v733 = vld [vmem:[%s4 + $0x38] sm:$0xff]
        %v734 = vld [vmem:[%s5] sm:$0xff]
        %v735 = vld [vmem:[%s5 + $0x8] sm:$0xff]
        %v736 = vld [vmem:[%s5 + $0x10] sm:$0xff]
        %v737 = vld [vmem:[%s5 + $0x18] sm:$0xff]
        %v738 = vld [vmem:[%s5 + $0x20] sm:$0xff]
        %v739 = vld [vmem:[%s5 + $0x28] sm:$0xff]
        %v740 = vld [vmem:[%s5 + $0x30] sm:$0xff]
        %v741 = vld [vmem:[%s5 + $0x38] sm:$0xff]
        %743 = vset.pattern.permute.xlu0 0
        %744 = vperm.xlu0 %743, %v734
        %v745 = vpop.permute.xlu0 %744
        %748 = vset.pattern.permute.xlu0 0
        %749 = vperm.xlu0 %748, %v735
        %v750 = vpop.permute.xlu0 %749
        %753 = vset.pattern.permute.xlu0 0
        %754 = vperm.xlu0 %753, %v736
        %v755 = vpop.permute.xlu0 %754
        %758 = vset.pattern.permute.xlu0 0
        %759 = vperm.xlu0 %758, %v737
        %v760 = vpop.permute.xlu0 %759
        %763 = vset.pattern.permute.xlu0 0
        %764 = vperm.xlu0 %763, %v738
        %v765 = vpop.permute.xlu0 %764
        %768 = vset.pattern.permute.xlu0 0
        %769 = vperm.xlu0 %768, %v739
        %v770 = vpop.permute.xlu0 %769
        %773 = vset.pattern.permute.xlu0 0
        %774 = vperm.xlu0 %773, %v740
        %v775 = vpop.permute.xlu0 %774
        %778 = vset.pattern.permute.xlu0 0
        %779 = vperm.xlu0 %778, %v741
        %v780 = vpop.permute.xlu0 %779
        %v783 = vsel %vm332, %v726, 0
        %v786 = vsel %vm332, %v727, 0
        %v789 = vsel %vm332, %v728, 0
        %v792 = vsel %vm332, %v729, 0
        %v795 = vsel %vm332, %v730, 0
        %v798 = vsel %vm332, %v731, 0
        %v801 = vsel %vm332, %v732, 0
        %v804 = vsel %vm332, %v733, 0
        %806 = vmatprep.subr.mxu0 0.0
        %807 = vmatpush1.msra.mxu0 0.0
        %808 = vmatprep.subr.mxu0 0.0
        %809 = vmatpush1.msra.mxu0 0.0
        %810 = vmatprep.subr.mxu0 0.0
        %811 = vmatpush1.msra.mxu0 0.0
        %812 = vmatprep.subr.mxu0 0.0
        %813 = vmatpush1.msra.mxu0 0.0
        %814 = vmatprep.subr.mxu0 0.0
        %815 = vmatpush1.msra.mxu0 0.0
        %816 = vmatprep.subr.mxu0 0.0
        %817 = vmatpush1.msra.mxu0 0.0
        %818 = vmatprep.subr.mxu0 0.0
        %819 = vmatpush1.msra.mxu0 0.0
        %820 = vmatprep.subr.mxu0 0.0
        %821 = vmatpush1.msra.mxu0 0.0
        %822 = vmatprep.subr.mxu0 0.0
        %823 = vmatpush1.msra.mxu0 %v725
        %824 = vmatprep.subr.mxu0 0.0
        %825 = vmatpush1.msra.mxu0 %v724
        %826 = vmatprep.subr.mxu0 0.0
        %827 = vmatpush1.msra.mxu0 %v723
        %828 = vmatprep.subr.mxu0 0.0
        %829 = vmatpush1.msra.mxu0 %v722
        %830 = vmatprep.subr.mxu0 0.0
        %831 = vmatpush1.msra.mxu0 %v721
        %832 = vmatprep.subr.mxu0 0.0
        %833 = vmatpush1.msra.mxu0 %v720
        %834 = vmatprep.subr.mxu0 0.0
        %835 = vmatpush1.msra.mxu0 %v719
        %836 = vmatprep.subr.mxu0 0.0
        %837 = vmatpush1.msra.mxu0 %v718
        %838 = vmatprep.subr.mxu0 0.0
        %839 = vmatpush2.msra.mxu0 0.0
        %840 = vmatprep.subr.mxu0 0.0
        %841 = vmatpush2.msra.mxu0 0.0
        %842 = vmatprep.subr.mxu0 0.0
        %843 = vmatpush2.msra.mxu0 0.0
        %844 = vmatprep.subr.mxu0 0.0
        %845 = vmatpush2.msra.mxu0 0.0
        %846 = vmatprep.subr.mxu0 0.0
        %847 = vmatpush2.msra.mxu0 0.0
        %848 = vmatprep.subr.mxu0 0.0
        %849 = vmatpush2.msra.mxu0 0.0
        %850 = vmatprep.subr.mxu0 0.0
        %851 = vmatpush2.msra.mxu0 0.0
        %852 = vmatprep.subr.mxu0 0.0
        %853 = vmatpush2.msra.mxu0 0.0
        %854 = vmatprep.subr.mxu0 0.0
        %855 = vmatpush2.msra.mxu0 0.0
        %856 = vmatprep.subr.mxu0 0.0
        %857 = vmatpush2.msra.mxu0 0.0
        %858 = vmatprep.subr.mxu0 0.0
        %859 = vmatpush2.msra.mxu0 0.0
        %860 = vmatprep.subr.mxu0 0.0
        %861 = vmatpush2.msra.mxu0 0.0
        %862 = vmatprep.subr.mxu0 0.0
        %863 = vmatpush2.msra.mxu0 0.0
        %864 = vmatprep.subr.mxu0 0.0
        %865 = vmatpush2.msra.mxu0 0.0
        %866 = vmatprep.subr.mxu0 0.0
        %867 = vmatpush2.msra.mxu0 0.0
        %868 = vmatprep.subr.mxu0 0.0
        %869 = vmatpush2.msra.mxu0 0.0
        %870 = vmatprep.mubr.f32.mxu0 0.0
        %871 = vmatmul.mubr.f32.gmra.mxu0 %v783
        %v872 = vpop.f32.mrf.mxu0
        %v873 = vadd.f32 %v745, %v872
        %v874 = vpop.f32.mrf.mxu0
        %875 = vmatprep.mubr.f32.mxu0 0.0
        %876 = vmatmul.mubr.f32.gmra.mxu0 %v786
        %v877 = vpop.f32.mrf.mxu0
        %v878 = vadd.f32 %v750, %v877
        %v879 = vpop.f32.mrf.mxu0
        %880 = vmatprep.mubr.f32.mxu0 0.0
        %881 = vmatmul.mubr.f32.gmra.mxu0 %v789
        %v882 = vpop.f32.mrf.mxu0
        %v883 = vadd.f32 %v755, %v882
        %v884 = vpop.f32.mrf.mxu0
        %885 = vmatprep.mubr.f32.mxu0 0.0
        %886 = vmatmul.mubr.f32.gmra.mxu0 %v792
        %v887 = vpop.f32.mrf.mxu0
        %v888 = vadd.f32 %v760, %v887
        %v889 = vpop.f32.mrf.mxu0
        %890 = vmatprep.mubr.f32.mxu0 0.0
        %891 = vmatmul.mubr.f32.gmra.mxu0 %v795
        %v892 = vpop.f32.mrf.mxu0
        %v893 = vadd.f32 %v765, %v892
        %v894 = vpop.f32.mrf.mxu0
        %895 = vmatprep.mubr.f32.mxu0 0.0
        %896 = vmatmul.mubr.f32.gmra.mxu0 %v798
        %v897 = vpop.f32.mrf.mxu0
        %v898 = vadd.f32 %v770, %v897
        %v899 = vpop.f32.mrf.mxu0
        %900 = vmatprep.mubr.f32.mxu0 0.0
        %901 = vmatmul.mubr.f32.gmra.mxu0 %v801
        %v902 = vpop.f32.mrf.mxu0
        %v903 = vadd.f32 %v775, %v902
        %v904 = vpop.f32.mrf.mxu0
        %905 = vmatprep.mubr.f32.mxu0 0.0
        %906 = vmatmul.mubr.f32.gmra.mxu0 %v804
        %v907 = vpop.f32.mrf.mxu0
        %v908 = vadd.f32 %v780, %v907
        %v909 = vpop.f32.mrf.mxu0
        %910 = vdwg.mxu0
        %v911 = vadd.f32 %v300, %v873
        %v912 = vadd.f32 %v301, %v878
        %v913 = vadd.f32 %v302, %v883
        %v914 = vadd.f32 %v303, %v888
        %v915 = vadd.f32 %v304, %v893
        %v916 = vadd.f32 %v305, %v898
        %v917 = vadd.f32 %v306, %v903
        %v918 = vadd.f32 %v307, %v908
        %v919 = vld [vmem:[%s299] sm:$0x1]
        %v921 = vlaneseq
        %v922 = vshrl.u32 %v921, 7
        %v923 = vsub.s32 0, %v922
        %v924 = vrot.slane %v919, %v923
        %v926 = vmul.f32 %v911, %v924
        %v927 = vmul.f32 %v912, %v924
        %v928 = vmul.f32 %v913, %v924
        %v929 = vmul.f32 %v914, %v924
        %v930 = vmul.f32 %v915, %v924
        %v931 = vmul.f32 %v916, %v924
        %v932 = vmul.f32 %v917, %v924
        %v933 = vmul.f32 %v918, %v924
        %934 = vst [vmem:[%s285] sm:$0xff] %v926
        %935 = vst [vmem:[%s285 + $0x8] sm:$0xff] %v927
        %936 = vst [vmem:[%s285 + $0x10] sm:$0xff] %v928
        %937 = vst [vmem:[%s285 + $0x18] sm:$0xff] %v929
        %938 = vst [vmem:[%s285 + $0x20] sm:$0xff] %v930
        %939 = vst [vmem:[%s285 + $0x28] sm:$0xff] %v931
        %940 = vst [vmem:[%s285 + $0x30] sm:$0xff] %v932
        %941 = vst [vmem:[%s285 + $0x38] sm:$0xff] %v933
        %s942 = sand.u32 %s182, 1
        %s943 = scalar_lea.sflag [#allocation3], %s942
        %s944 = sand.u32 %s182, 1
        %s945 = smul.addr %s944, 64
        %s946 = scalar_lea.vmem [#allocation2], %s945
        // Predicated region
        $region45: #{tpu_custom_call.1} parent=43 // pred_check
          %p947 = pneg %p192
        $region46: #{tpu_custom_call.1} parent=43 // pred_check_branch
          %949 = sbr.rel (%p947) target = $region48
        $region47: #{tpu_custom_call.1} parent=43 // pred_region
          %s951 = ssub.s32 1024, 1024
          %952 = vsyncadd %s943, %s951
          %s953 = smul.addr %s24, 8
          %s954 = sadd.s32 %s25, %s953
          %s955 = smul.addr %s954, 128
          %s956 = scalar_lea.hbm %s6, %s955
          %s957 = sshll.u32 %s946, 4
          %s958 = int_to_ptr.vmem [resolvable:$true] %s957
          %963 = dma.vmem_to_hbm [thread:$0]  %s958, 1024, %s956, %s943, 128, 128, 8
        $region48: #{tpu_custom_call.1} parent=43 // pred_fallthru
          _
      $region44: #{tpu_custom_call.1} parent=5 // pred_fallthru
        _
      %p964 = scmp.le.s32.totalorder 2, %s15
      // Predicated region
      $region49: #{tpu_custom_call.1} parent=5 // pred_check
        %p965 = pneg %p964
      $region50: #{tpu_custom_call.1} parent=5 // pred_check_branch
        %967 = sbr.rel (%p965) target = $region52
      $region51: #{tpu_custom_call.1} parent=5 // pred_region
        %s968 = ssub.s32 %s15, 2
        // Predicated region
        $region53: #{tpu_custom_call.1} parent=51 // pred_check
          %p969 = pneg %p198
        $region54: #{tpu_custom_call.1} parent=51 // pred_check_branch
          %971 = sbr.rel (%p969) target = $region56
        $region55: #{tpu_custom_call.1} parent=51 // pred_region
          %s972 = sand.u32 %s183, 1
          %s973 = scalar_lea.sflag [#allocation3], %s972
          %s974 = sand.u32 %s183, 1
          %s975 = smul.addr %s974, 64
          %s976 = scalar_lea.vmem [#allocation2], %s975
          %977 = dma.done %s973, 1024
        $region56: #{tpu_custom_call.1} parent=51 // pred_fallthru
          _
      $region52: #{tpu_custom_call.1} parent=5 // pred_fallthru
        _
    $region6: #{tpu_custom_call.1} parent=1 // loop_footer
      %s19 = sadd.s32 1, %s15
    $region7: #{tpu_custom_call.1} parent=1 // loop_footer_branch
      %14 = sbr.rel target = $region3
    $region8: #{tpu_custom_call.1} parent=1 // loop_exit
      _
    %978 = vsyncpa [#allocation3], 1
    %s979 = scalar_lea.sflag [#allocation3], 1
    %980 = vsyncpa %s979, 1

</llo_original>
